<compile_context>
chip_gen: v7x
topology: tpu7x:2x2x1
jax: 0.10.0
libtpu: 0.0.40
codegen_flags: <defaults>
</compile_context>

<pallas_src>
import jax
import jax.numpy as jnp
from jax.experimental import pallas as pl
from jax.experimental.pallas import tpu as pltpu


def _focus_conv_kernel(w_ref, x_ref, b_ref, o_ref):
    # w_ref: (C2, K)  bf16  1x1 conv weight with BN scale folded in
    # x_ref: (K, TM)  bf16  channels-major pixel tile
    # b_ref: (C2, 1)  f32   folded BN bias
    # o_ref: (C2, TM) f32   lane-dense output tile
    y = jnp.dot(w_ref[...], x_ref[...], preferred_element_type=jnp.float32)
    y = y + b_ref[...]
    # LeakyReLU(negative_slope=0.1)
    o_ref[...] = jnp.where(y >= 0, y, 0.1 * y).astype(o_ref.dtype)


def _pick_tile(p, target=2048):
    """Largest lane-dense (multiple-of-128) tile dividing p, else the full dim."""
    if p <= target:
        return p
    t = (target // 128) * 128
    while t >= 128:
        if p % t == 0:
            return t
        t -= 128
    return p  # rare fallback: full pixel dim (always legal, may be large)


def focus_forward(x, weight, gamma, beta, running_mean, running_var,
                  eps=1e-5, target_tile=2048):
    """Forward of Focus(c1, c2, k=1): space-to-depth then Conv(4*c1, c2, 1, 1) + BN + LeakyReLU."""
    N, C1, H, W = x.shape
    Ho, Wo = H // 2, W // 2
    P = Ho * Wo
    C2 = weight.shape[0]
    K = 4 * C1

    # Space-to-depth directly into channels-major layout with a single transpose:
    #   cat[n, (wp*2 + hp)*C1 + c, ho, wo] = x[n, c, 2*ho + hp, 2*wo + wp]
    # matching torch.cat([x[...,::2,::2], x[...,1::2,::2], x[...,::2,1::2], x[...,1::2,1::2]], 1).
    x_r = x.reshape(N, C1, Ho, 2, Wo, 2)                      # (n, c, ho, hp, wo, wp)
    xk = jnp.transpose(x_r, (0, 5, 3, 1, 2, 4))               # (n, wp, hp, c, ho, wo)
    xk = xk.reshape(N, K, P).astype(jnp.bfloat16)             # (N, K, Ho*Wo)

    # Fold eval-mode BatchNorm: scale into the conv weight, shift into a bias vector.
    scale_v = gamma / jnp.sqrt(running_var + eps)
    bias_v = beta - running_mean * scale_v
    wmat = (weight.reshape(C2, K) * scale_v[:, None]).astype(jnp.bfloat16)   # (C2, K)
    bias = bias_v.reshape(C2, 1).astype(jnp.float32)                         # (C2, 1)

    tm = _pick_tile(P, target_tile)        # divides P by construction
    grid = (N, P // tm)

    cost = pl.CostEstimate(
        flops=2 * N * P * K * C2,
        transcendentals=0,
        bytes_accessed=2 * N * K * P + 2 * K * C2 + 4 * C2 + 4 * N * C2 * P,
    )

    out = pl.pallas_call(
        _focus_conv_kernel,
        out_shape=jax.ShapeDtypeStruct((N, C2, P), jnp.float32),
        grid_spec=pltpu.PrefetchScalarGridSpec(
            num_scalar_prefetch=0,
            grid=grid,
            in_specs=[
                pl.BlockSpec((C2, K), lambda n, i: (0, 0)),          # weight (resident)
                pl.BlockSpec((None, K, tm), lambda n, i: (n, 0, i)),  # x tile, lane-dense
                pl.BlockSpec((C2, 1), lambda n, i: (0, 0)),           # bias (resident)
            ],
            out_specs=pl.BlockSpec((None, C2, tm), lambda n, i: (n, 0, i)),
        ),
        compiler_params=pltpu.CompilerParams(
            dimension_semantics=("parallel", "parallel")),
        cost_estimate=cost,
    )(wmat, xk, bias)

    # (N, C2, Ho*Wo) -> (N, C2, Ho, Wo): a free reshape, already NCHW channel-major.
    return out.reshape(N, C2, Ho, Wo)


if __name__ == "__main__":
    # Focus(c1=4, c2=32, k=1): conv weight shape (32, 16, 1, 1), BN over 32 channels.
    N, C1, H, W = 2, 4, 16, 16
    C2 = 32

    key = jax.random.PRNGKey(0)
    k1, k2, k3, k4, k5, k6 = jax.random.split(key, 6)
    x = jax.random.normal(k1, (N, C1, H, W), jnp.float32)
    weight = 0.1 * jax.random.normal(k2, (C2, 4 * C1, 1, 1), jnp.float32)
    gamma = 1.0 + 0.1 * jax.random.normal(k3, (C2,), jnp.float32)
    beta = 0.1 * jax.random.normal(k4, (C2,), jnp.float32)
    running_mean = 0.05 * jax.random.normal(k5, (C2,), jnp.float32)
    running_var = jnp.abs(1.0 + 0.1 * jax.random.normal(k6, (C2,), jnp.float32))

    out = jax.jit(focus_forward)(x, weight, gamma, beta, running_mean, running_var)
    jax.block_until_ready(out)
    assert out.shape == (N, C2, H // 2, W // 2)

    # Pure-JAX f32 reference for a sanity check (bf16 operand tolerance).
    cat = jnp.concatenate(
        [x[:, :, ::2, ::2], x[:, :, 1::2, ::2],
         x[:, :, ::2, 1::2], x[:, :, 1::2, 1::2]], axis=1)
    y = jnp.einsum('nkhw,ck->nchw', cat, weight.reshape(C2, 4 * C1))
    scale = gamma / jnp.sqrt(running_var + 1e-5)
    y = y * scale[None, :, None, None] + (beta - running_mean * scale)[None, :, None, None]
    ref = jnp.where(y >= 0, y, 0.1 * y)
    assert jnp.allclose(out, ref, atol=5e-2, rtol=5e-2), float(jnp.max(jnp.abs(out - ref)))

    print("KERNEL_OK")
</pallas_src>

<mosaic_0001>
module attributes {stable_mosaic.version = 11 : i64} {
  func.func @_focus_conv_kernel(%arg0: i32, %arg1: i32, %arg2: memref<32x16xbf16, #tpu.memory_space<vmem>>, %arg3: memref<1x16x64xbf16, #tpu.memory_space<vmem>>, %arg4: memref<32x1xf32, #tpu.memory_space<vmem>>, %arg5: memref<1x32x64xf32, #tpu.memory_space<vmem>>) attributes {dimension_semantics = [#tpu.dimension_semantics<parallel>, #tpu.dimension_semantics<parallel>], iteration_bounds = array<i64: 2, 1>, scalar_prefetch = 0 : i64, scratch_operands = 0 : i64, tpu.core_type = #tpu.core_type<tc>, window_params = [{pipeline_mode = #tpu.pipeline_mode<synchronous>, transform_indices = @transform_0, window_bounds = array<i64: 32, 16>}, {transform_indices = @transform_1, window_bounds = array<i64: 1, 16, 64>}, {pipeline_mode = #tpu.pipeline_mode<synchronous>, transform_indices = @transform_2, window_bounds = array<i64: 32, 1>}, {transform_indices = @transform_3, window_bounds = array<i64: 1, 32, 64>}]} {
    %c0 = arith.constant 0 : index
    %c0_0 = arith.constant 0 : index
    %0 = vector.load %arg2[%c0, %c0_0] : memref<32x16xbf16, #tpu.memory_space<vmem>>, vector<32x16xbf16>
    %c0_1 = arith.constant 0 : index
    %c0_2 = arith.constant 0 : index
    %c0_3 = arith.constant 0 : index
    %1 = vector.load %arg3[%c0_1, %c0_2, %c0_3] : memref<1x16x64xbf16, #tpu.memory_space<vmem>>, vector<1x16x64xbf16>
    %2 = vector.shape_cast %1 : vector<1x16x64xbf16> to vector<16x64xbf16>
    %cst = arith.constant dense<0.000000e+00> : vector<32x64xf32>
    %3 = tpu.matmul %0, %2, %cst {dimension_numbers = #tpu.dot_dimension_numbers<[1], [0], [0], [1], [0, 0, 1, 1], [], []>} : vector<32x16xbf16>, vector<16x64xbf16>, vector<32x64xf32> -> vector<32x64xf32>
    %c0_4 = arith.constant 0 : index
    %c0_5 = arith.constant 0 : index
    %4 = vector.load %arg4[%c0_4, %c0_5] : memref<32x1xf32, #tpu.memory_space<vmem>>, vector<32x1xf32>
    %5 = vector.broadcast %4 : vector<32x1xf32> to vector<32x64xf32>
    %6 = arith.addf %3, %5 : vector<32x64xf32>
    %cst_6 = arith.constant 0.000000e+00 : f32
    %7 = vector.broadcast %cst_6 : f32 to vector<32x64xf32>
    %8 = arith.cmpf oge, %6, %7 : vector<32x64xf32>
    %cst_7 = arith.constant 1.000000e-01 : f32
    %9 = vector.broadcast %cst_7 : f32 to vector<32x64xf32>
    %10 = arith.mulf %9, %6 : vector<32x64xf32>
    %11 = arith.select %8, %6, %10 : vector<32x64xi1>, vector<32x64xf32>
    %c0_8 = arith.constant 0 : index
    %c0_9 = arith.constant 0 : index
    %c0_10 = arith.constant 0 : index
    %12 = vector.load %arg5[%c0_8, %c0_9, %c0_10] : memref<1x32x64xf32, #tpu.memory_space<vmem>>, vector<1x32x64xf32>
    %13 = vector.shape_cast %12 : vector<1x32x64xf32> to vector<32x64xf32>
    %14 = vector.shape_cast %11 : vector<32x64xf32> to vector<1x32x64xf32>
    tpu.vector_store %arg5[%c0_8, %c0_9, %c0_10], %14 {strides = array<i32>} : memref<1x32x64xf32, #tpu.memory_space<vmem>>, vector<1x32x64xf32>,
    return
  }
  func.func @transform_0(%arg0: i32, %arg1: i32) -> (i32, i32) {
    %c0_i32 = arith.constant 0 : i32
    %c0_i32_0 = arith.constant 0 : i32
    %c0_i32_1 = arith.constant 0 : i32
    return %c0_i32, %c0_i32_0 : i32, i32
  }
  func.func @transform_1(%arg0: i32, %arg1: i32) -> (i32, i32, i32) {
    %c0_i32 = arith.constant 0 : i32
    %c0_i32_0 = arith.constant 0 : i32
    return %arg0, %c0_i32, %arg1 : i32, i32, i32
  }
  func.func @transform_2(%arg0: i32, %arg1: i32) -> (i32, i32) {
    %c0_i32 = arith.constant 0 : i32
    %c0_i32_0 = arith.constant 0 : i32
    %c0_i32_1 = arith.constant 0 : i32
    return %c0_i32, %c0_i32_0 : i32, i32
  }
  func.func @transform_3(%arg0: i32, %arg1: i32) -> (i32, i32, i32) {
    %c0_i32 = arith.constant 0 : i32
    %c0_i32_0 = arith.constant 0 : i32
    return %arg0, %c0_i32, %arg1 : i32, i32, i32
  }
}

</mosaic_0001>

<llo_original>
// kernel: focus_forward.1
$region0: #{focus_forward.1}
  #allocation0 [shape = 'u32[]', space=smem, size = 0x4, offset = 0x4, fixed_abs, tag = 'smem constant byte address 0x4 - core index']
  #allocation1 [shape = 'u32[144,128]{1,0:T(1,128)}', space=vmem, size = 0x12000, scoped, tag = 'internal scratch']
  %s0 = inlined_call_operand.vmem [shape: bf16[32,16], index: 0, kind: input, shape index: {}]
  %s1 = inlined_call_operand.vmem [shape: bf16[2,16,64], index: 1, kind: input, shape index: {}]
  %s2 = inlined_call_operand.vmem [shape: f32[32,1], index: 2, kind: input, shape index: {}]
  %s3 = inlined_call_operand.vmem [shape: f32[2,32,64], index: 3, kind: output, shape index: {}]
  %s4 = sld [smem:[#allocation0]]
  $region45: #{focus_forward.1} parent=0
    _
  %s6 = ssub.s32 1, %s4
  %s7 = scalar_select 0, %s6, %s4
  loop: start=0, step=1, limit=4
  $region2: #{focus_forward.1} parent=0 // loop_pre_header
    _
  $region3: #{focus_forward.1} parent=0 // loop_header
    %s9 = sphi 0, %s13
    %p10 = scmp.ge.s32.totalorder %s9, 4
    %s16 = sphi 0, %s28
    %s17 = sphi 0, %s24
    %s18 = sphi 0, %s16
    %s19 = sphi 0, %s17
    %s20 = sphi 0, %s18
    %s21 = sphi 0, %s19
    %s29 = sphi 0, %s29
    %s31 = sphi 0, %s29
    %s32 = sphi 0, %s31
    %s46 = sphi 0, %s32
    %s54 = sphi 0, %s56
    %s57 = sphi 0, %s54
    %s58 = sphi 0, %s57
    %s74 = sphi 0, %s58
    %s78 = sphi 0, %s78
    %s80 = sphi 0, %s78
    %s81 = sphi 0, %s80
    %s95 = sphi 0, %s81
    %s103 = sphi 0, %s105
    %s106 = sphi 0, %s103
    %s107 = sphi 0, %s106
    %s123 = sphi 0, %s107
  $region4: #{focus_forward.1} parent=0 // loop_header_branch
    %12 = sbr.rel (%p10) target = $region8
  $region5: #{focus_forward.1} parent=0 // loop_body
    %s14 = ssub.s32 %s9, 1
    %s15 = ssub.s32 %s9, 2
    %s22 = sadd.s32 1, %s17
    %p23 = scmp.ge.s32.totalorder %s22, 1
    %s24 = scalar_select %p23, 0, %s22
    %s25 = sadd.s32 1, %s16
    %s26 = scalar_select %p23, %s25, %s16
    %p27 = scmp.ge.s32.totalorder %s26, 2
    %s28 = scalar_select %p27, 0, %s26
    %s30 = sadd.s32 %s29, 1
    %p33 = scmp.eq.s32.totalorder %s9, 1
    %p34 = scmp.ne.s32.totalorder %s29, %s31
    %p35 = scmp.eq.s32.totalorder %s9, 0
    %p36 = por %p34, %p35
    %p37 = scmp.ne.s32.totalorder %s29, %s31
    %p38 = scmp.eq.s32.totalorder %s14, 1
    %p39 = por %p37, %p38
    %p40 = scmp.ne.s32.totalorder %s31, %s32
    %p41 = scmp.eq.s32.totalorder %s14, 0
    %p42 = por %p40, %p41
    %p43 = scmp.ne.s32.totalorder %s31, %s32
    %p44 = scmp.eq.s32.totalorder %s15, 1
    %p45 = por %p43, %p44
    %p47 = scmp.ne.s32.totalorder %s32, %s46
    %p48 = scmp.eq.s32.totalorder %s15, 0
    %p49 = por %p47, %p48
    %s50 = ssub.s32 %s16, %s28
    %s51 = ssub.s32 %s17, %s24
    %s52 = sor.u32 %s50, %s51
    %p53 = scmp.eq.s32.totalorder %s52, 0
    %s55 = sadd.s32 %s54, 1
    %s56 = scalar_select %p53, %s54, %s55
    %p59 = pneg %p53
    %p60 = scmp.eq.s32.totalorder %s9, 1
    %p61 = por %p59, %p60
    %p62 = scmp.ne.s32.totalorder %s54, %s57
    %p63 = scmp.eq.s32.totalorder %s9, 0
    %p64 = por %p62, %p63
    %p65 = scmp.ne.s32.totalorder %s54, %s57
    %p66 = scmp.eq.s32.totalorder %s14, 1
    %p67 = por %p65, %p66
    %p68 = scmp.ne.s32.totalorder %s57, %s58
    %p69 = scmp.eq.s32.totalorder %s14, 0
    %p70 = por %p68, %p69
    %p71 = scmp.ne.s32.totalorder %s57, %s58
    %p72 = scmp.eq.s32.totalorder %s15, 1
    %p73 = por %p71, %p72
    %p75 = scmp.ne.s32.totalorder %s58, %s74
    %p76 = scmp.eq.s32.totalorder %s15, 0
    %p77 = por %p75, %p76
    %s79 = sadd.s32 %s78, 1
    %p82 = scmp.eq.s32.totalorder %s9, 1
    %p83 = scmp.ne.s32.totalorder %s78, %s80
    %p84 = scmp.eq.s32.totalorder %s9, 0
    %p85 = por %p83, %p84
    %p86 = scmp.ne.s32.totalorder %s78, %s80
    %p87 = scmp.eq.s32.totalorder %s14, 1
    %p88 = por %p86, %p87
    %p89 = scmp.ne.s32.totalorder %s80, %s81
    %p90 = scmp.eq.s32.totalorder %s14, 0
    %p91 = por %p89, %p90
    %p92 = scmp.ne.s32.totalorder %s80, %s81
    %p93 = scmp.eq.s32.totalorder %s15, 1
    %p94 = por %p92, %p93
    %p96 = scmp.ne.s32.totalorder %s81, %s95
    %p97 = scmp.eq.s32.totalorder %s15, 0
    %p98 = por %p96, %p97
    %s99 = ssub.s32 %s16, %s28
    %s100 = ssub.s32 %s17, %s24
    %s101 = sor.u32 %s99, %s100
    %p102 = scmp.eq.s32.totalorder %s101, 0
    %s104 = sadd.s32 %s103, 1
    %s105 = scalar_select %p102, %s103, %s104
    %p108 = pneg %p102
    %p109 = scmp.eq.s32.totalorder %s9, 1
    %p110 = por %p108, %p109
    %p111 = scmp.ne.s32.totalorder %s103, %s106
    %p112 = scmp.eq.s32.totalorder %s9, 0
    %p113 = por %p111, %p112
    %p114 = scmp.ne.s32.totalorder %s103, %s106
    %p115 = scmp.eq.s32.totalorder %s14, 1
    %p116 = por %p114, %p115
    %p117 = scmp.ne.s32.totalorder %s106, %s107
    %p118 = scmp.eq.s32.totalorder %s14, 0
    %p119 = por %p117, %p118
    %p120 = scmp.ne.s32.totalorder %s106, %s107
    %p121 = scmp.eq.s32.totalorder %s15, 1
    %p122 = por %p120, %p121
    %p124 = scmp.ne.s32.totalorder %s107, %s123
    %p125 = scmp.eq.s32.totalorder %s15, 0
    %p126 = por %p124, %p125
    %p127 = scmp.le.s32.totalorder 1, %s9
    %p128 = scmp.lt.s32.totalorder %s9, 3
    %p129 = pnand %p127, %p128
    %p130 = pneg %p129
    // Predicated region
    $region9: #{focus_forward.1} parent=5 // pred_check
      _
    $region10: #{focus_forward.1} parent=5 // pred_check_branch
      %132 = sbr.rel (%p129) target = $region12
    $region11: #{focus_forward.1} parent=5 // pred_region
      %s133 = ssub.s32 %s9, 1
      // Predicated region
      $region13: #{focus_forward.1} parent=11 // pred_check
        %p134 = pneg %p42
      $region14: #{focus_forward.1} parent=11 // pred_check_branch
        %136 = sbr.rel (%p134) target = $region16
      $region15: #{focus_forward.1} parent=11 // pred_region
        _
      $region16: #{focus_forward.1} parent=11 // pred_fallthru
        _
      // Predicated region
      $region17: #{focus_forward.1} parent=11 // pred_check
        %p137 = pneg %p91
      $region18: #{focus_forward.1} parent=11 // pred_check_branch
        %139 = sbr.rel (%p137) target = $region20
      $region19: #{focus_forward.1} parent=11 // pred_region
        _
      $region20: #{focus_forward.1} parent=11 // pred_fallthru
        _
    $region12: #{focus_forward.1} parent=5 // pred_fallthru
      _
    %p140 = scmp.lt.s32.totalorder %s9, 2
    // Predicated region
    $region21: #{focus_forward.1} parent=5 // pred_check
      %p141 = pneg %p140
    $region22: #{focus_forward.1} parent=5 // pred_check_branch
      %143 = sbr.rel (%p141) target = $region24
    $region23: #{focus_forward.1} parent=5 // pred_region
      // Predicated region
      $region25: #{focus_forward.1} parent=23 // pred_check
        %p144 = pneg %p64
      $region26: #{focus_forward.1} parent=23 // pred_check_branch
        %146 = sbr.rel (%p144) target = $region28
      $region27: #{focus_forward.1} parent=23 // pred_region
        %p147 = scmp.lt.s32.totalorder %s16, 1
        %s148 = scalar_select %p147, %s16, 1
        %p149 = scmp.lt.s32.totalorder %s17, 0
        %s150 = scalar_select %p149, %s17, 0
        %s151 = smul.addr %s148, 2
        %s152 = sadd.s32 %s150, %s151
        %s153 = smul.addr %s152, 4
        %s154 = scalar_lea.vmem %s1, %s153
      $region28: #{focus_forward.1} parent=23 // pred_fallthru
        _
    $region24: #{focus_forward.1} parent=5 // pred_fallthru
      _
    %p155 = scmp.le.s32.totalorder 1, %s9
    %p156 = scmp.lt.s32.totalorder %s9, 3
    %p157 = pnand %p155, %p156
    %p158 = pneg %p157
    // Predicated region
    $region29: #{focus_forward.1} parent=5 // pred_check
      _
    $region30: #{focus_forward.1} parent=5 // pred_check_branch
      %160 = sbr.rel (%p157) target = $region32
    $region31: #{focus_forward.1} parent=5 // pred_region
      %s161 = ssub.s32 %s9, 1
      %p162 = pneg %p42
      %p163 = pneg %p39
      %p164 = scmp.lt.s32.totalorder %s18, 1
      %s165 = scalar_select %p164, %s18, 1
      %p166 = scmp.lt.s32.totalorder %s19, 0
      %s167 = scalar_select %p166, %s19, 0
      %s168 = smul.addr %s165, 2
      %s169 = sadd.s32 %s167, %s168
      %s170 = smul.addr %s169, 4
      %s171 = scalar_lea.vmem %s1, %s170
      %p172 = pneg %p70
      %p173 = pneg %p67
      %p174 = pneg %p91
      %p175 = pneg %p88
      %p176 = pneg %p119
      %p177 = pneg %p116
      %p178 = scmp.lt.s32.totalorder %s18, 1
      %s179 = scalar_select %p178, %s18, 1
      %p180 = scmp.lt.s32.totalorder %s19, 0
      %s181 = scalar_select %p180, %s19, 0
      %s182 = smul.addr %s179, 4
      %s183 = sadd.s32 %s181, %s182
      %s184 = smul.addr %s183, 8
      %s185 = scalar_lea.vmem %s3, %s184
      %p186 = scmp.lt.s32.totalorder %s18, 1
      %s187 = scalar_select %p186, %s18, 1
      %p188 = scmp.lt.s32.totalorder %s19, 0
      %s189 = scalar_select %p188, %s19, 0
      %s190 = smul.addr %s187, 2
      %s191 = sadd.s32 %s189, %s190
      %s192 = smul.addr %s191, 4
      %s193 = scalar_lea.vmem %s1, %s192
      %p194 = scmp.lt.s32.totalorder %s18, 1
      %s195 = scalar_select %p194, %s18, 1
      %p196 = scmp.lt.s32.totalorder %s19, 0
      %s197 = scalar_select %p196, %s19, 0
      %s198 = smul.addr %s195, 4
      %s199 = sadd.s32 %s197, %s198
      %s200 = smul.addr %s199, 8
      %s201 = scalar_lea.vmem %s3, %s200
      %v203 = vld [vmem:[%s0] sm:$0xf]
      %v204 = vld [vmem:[%s0 + $0x4] sm:$0xf]
      %v205 = vld [vmem:[%s0 + $0x8] sm:$0xf]
      %v206 = vld [vmem:[%s0 + $0xc] sm:$0xf]
      %v207 = vld [vmem:[%s193] sm:$0xf]
      %v208 = vld [vmem:[%s193 + $0x4] sm:$0xf]
      %v209 = vld [vmem:[%s2] sm:$0xff]
      %v210 = vld [vmem:[%s2 + $0x8] sm:$0xff]
      %v211 = vld [vmem:[%s2 + $0x10] sm:$0xff]
      %v212 = vld [vmem:[%s2 + $0x18] sm:$0xff]
      %214 = vset.pattern.permute.xlu0 0
      %215 = vperm.xlu0 %214, %v209
      %v216 = vpop.permute.xlu0 %215
      %219 = vset.pattern.permute.xlu0 0
      %220 = vperm.xlu0 %219, %v210
      %v221 = vpop.permute.xlu0 %220
      %224 = vset.pattern.permute.xlu0 0
      %225 = vperm.xlu0 %224, %v211
      %v226 = vpop.permute.xlu0 %225
      %229 = vset.pattern.permute.xlu0 0
      %230 = vperm.xlu0 %229, %v212
      %v231 = vpop.permute.xlu0 %230
      %v237 = vunpack.c.l.b16 %v203
      %v238 = vunpack.c.l.b16 %v204
      %v239 = vunpack.c.l.b16 %v205
      %v240 = vunpack.c.l.b16 %v206
      %v241 = vpack.c.b16 %v238, %v237
      %v242 = vpack.c.b16 %v240, %v239
      %v245 = vunpack.c.l.b16 %v207
      %v246 = vunpack.c.l.b16 %v208
      %v247 = vpack.c.b16 %v246, %v245
      %vm249 = vcmask 130048
      %v251 = vsel %vm249, %v241, 0
      %v254 = vsel %vm249, %v242, 0
      %256 = vmatprep.subr.bf16.mxu0 0
      %257 = vmatpush1.bf16.msra.mxu0 %v247
      %258 = vmatprep.subr.bf16.mxu0 0
      %259 = vmatpush1.bf16.msra.mxu0 0
      %260 = vmatprep.subr.bf16.mxu0 0
      %261 = vmatpush1.bf16.msra.mxu0 0
      %262 = vmatprep.subr.bf16.mxu0 0
      %263 = vmatpush1.bf16.msra.mxu0 0
      %264 = vmatprep.subr.bf16.mxu0 0
      %265 = vmatpush1.bf16.msra.mxu0 0
      %266 = vmatprep.subr.bf16.mxu0 0
      %267 = vmatpush1.bf16.msra.mxu0 0
      %268 = vmatprep.subr.bf16.mxu0 0
      %269 = vmatpush1.bf16.msra.mxu0 0
      %270 = vmatprep.subr.bf16.mxu0 0
      %271 = vmatpush1.bf16.msra.mxu0 0
      %272 = vmatprep.subr.bf16.mxu0 0
      %273 = vmatpush1.bf16.msra.mxu0 0
      %274 = vmatprep.subr.bf16.mxu0 0
      %275 = vmatpush1.bf16.msra.mxu0 0
      %276 = vmatprep.subr.bf16.mxu0 0
      %277 = vmatpush1.bf16.msra.mxu0 0
      %278 = vmatprep.subr.bf16.mxu0 0
      %279 = vmatpush1.bf16.msra.mxu0 0
      %280 = vmatprep.subr.bf16.mxu0 0
      %281 = vmatpush1.bf16.msra.mxu0 0
      %282 = vmatprep.subr.bf16.mxu0 0
      %283 = vmatpush1.bf16.msra.mxu0 0
      %284 = vmatprep.subr.bf16.mxu0 0
      %285 = vmatpush1.bf16.msra.mxu0 0
      %286 = vmatprep.subr.bf16.mxu0 0
      %287 = vmatpush1.bf16.msra.mxu0 0
      %288 = vmatprep.mubr.bf16.mxu0 0
      %289 = vmatmul.mubr.bf16.gmra.mrb[0].mxu0 %v251
      %v290 = vpop.f32.mrb[0].mxu0
      %v291 = vadd.f32 %v216, %v290
      %v292 = vpop.f32.mrb[0].mxu0
      %v293 = vpop.f32.mrb[0].mxu0
      %v294 = vadd.f32 %v221, %v293
      %v295 = vpop.f32.mrb[0].mxu0
      %296 = vmatprep.mubr.bf16.mxu0 0
      %297 = vmatmul.mubr.bf16.gmra.mrb[0].mxu0 %v254
      %v298 = vpop.f32.mrb[0].mxu0
      %v299 = vadd.f32 %v226, %v298
      %v300 = vpop.f32.mrb[0].mxu0
      %v301 = vpop.f32.mrb[0].mxu0
      %v302 = vadd.f32 %v231, %v301
      %v303 = vpop.f32.mrb[0].mxu0
      %304 = vdwg.mxu0
      %vm305 = vcmp.ge.f32.partialorder %v291, 0.0
      %vm306 = vcmp.ge.f32.partialorder %v294, 0.0
      %vm307 = vcmp.ge.f32.partialorder %v299, 0.0
      %vm308 = vcmp.ge.f32.partialorder %v302, 0.0
      %v309 = vmul.f32 %v291, 0.1
      %v310 = vmul.f32 %v294, 0.1
      %v311 = vmul.f32 %v299, 0.1
      %v312 = vmul.f32 %v302, 0.1
      %v313 = vsel %vm305, %v291, %v309
      %v314 = vsel %vm306, %v294, %v310
      %v315 = vsel %vm307, %v299, %v311
      %v316 = vsel %vm308, %v302, %v312
      %vm317 = vcmask 523264
      %318 = vst.msk [vmem:[%s201] sm:$0xff] %vm317, %v313
      %319 = vst.msk [vmem:[%s201 + $0x8] sm:$0xff] %vm317, %v314
      %320 = vst.msk [vmem:[%s201 + $0x10] sm:$0xff] %vm317, %v315
      %321 = vst.msk [vmem:[%s201 + $0x18] sm:$0xff] %vm317, %v316
      %p322 = scmp.lt.s32.totalorder %s18, 1
      %s323 = scalar_select %p322, %s18, 1
      %p324 = scmp.lt.s32.totalorder %s19, 0
      %s325 = scalar_select %p324, %s19, 0
      %s326 = smul.addr %s323, 4
      %s327 = sadd.s32 %s325, %s326
      %s328 = smul.addr %s327, 8
      %s329 = scalar_lea.vmem %s3, %s328
      // Predicated region
      $region33: #{focus_forward.1} parent=31 // pred_check
        %p330 = pneg %p116
      $region34: #{focus_forward.1} parent=31 // pred_check_branch
        %332 = sbr.rel (%p330) target = $region36
      $region35: #{focus_forward.1} parent=31 // pred_region
        _
      $region36: #{focus_forward.1} parent=31 // pred_fallthru
        _
    $region32: #{focus_forward.1} parent=5 // pred_fallthru
      _
    %p333 = scmp.le.s32.totalorder 2, %s9
    // Predicated region
    $region37: #{focus_forward.1} parent=5 // pred_check
      %p334 = pneg %p333
    $region38: #{focus_forward.1} parent=5 // pred_check_branch
      %336 = sbr.rel (%p334) target = $region40
    $region39: #{focus_forward.1} parent=5 // pred_region
      %s337 = ssub.s32 %s9, 2
      // Predicated region
      $region41: #{focus_forward.1} parent=39 // pred_check
        %p338 = pneg %p122
      $region42: #{focus_forward.1} parent=39 // pred_check_branch
        %340 = sbr.rel (%p338) target = $region44
      $region43: #{focus_forward.1} parent=39 // pred_region
        %p341 = scmp.lt.s32.totalorder %s20, 1
        %s342 = scalar_select %p341, %s20, 1
        %p343 = scmp.lt.s32.totalorder %s21, 0
        %s344 = scalar_select %p343, %s21, 0
        %s345 = smul.addr %s342, 4
        %s346 = sadd.s32 %s344, %s345
        %s347 = smul.addr %s346, 8
        %s348 = scalar_lea.vmem %s3, %s347
      $region44: #{focus_forward.1} parent=39 // pred_fallthru
        _
    $region40: #{focus_forward.1} parent=5 // pred_fallthru
      _
  $region6: #{focus_forward.1} parent=0 // loop_footer
    %s13 = sadd.s32 1, %s9
  $region7: #{focus_forward.1} parent=0 // loop_footer_branch
    %8 = sbr.rel target = $region3
  $region8: #{focus_forward.1} parent=0 // loop_exit
    _

</llo_original>
